<compile_context>
chip_gen: v5e
topology: v5e:2x2
jax: 0.10.0
libtpu: 0.0.40
codegen_flags: <defaults>
</compile_context>

<pallas_src>
import jax
import jax.numpy as jnp
from jax.experimental import pallas as pl
from jax.experimental.pallas import tpu as pltpu

_LANE = 128
# ~2 MiB per buffer: measured HBM-roofline plateau for mem-bound elementwise ops,
# and safely inside every generation's scoped-VMEM default with double buffering.
_TARGET_TILE_BYTES = 2 * 1024 * 1024


def _elu1_kernel(x_ref, o_ref):
    x = x_ref[...]
    # Widen in-register only (no HBM cost). ELU(x)+1 == where(x>0, x+1, exp(x)).
    xf = x.astype(jnp.float32)
    o_ref[...] = jnp.where(xf > 0, xf + 1.0, jnp.exp(xf)).astype(o_ref.dtype)


def _elu1_jnp(x):
    # Same math as the kernel, for tiny / unaligned tails (computed in f32).
    xf = x.astype(jnp.float32)
    return jnp.where(xf > 0, xf + 1.0, jnp.exp(xf)).astype(x.dtype)


def elu1(x: jax.Array) -> jax.Array:
    """Apply ELU(x) + 1 elementwise via a Pallas TPU kernel.

    Matches torch nn.ELU()(x) + 1 semantics for any shape / float dtype.
    HBM traffic stays in the input dtype; compute is f32 in-register.
    """
    orig_shape = x.shape
    dtype = x.dtype
    n = x.size

    itemsize = jnp.dtype(dtype).itemsize
    # Sublane packing by element width: f32 -> 8, bf16/f16 -> 16, 8-bit -> 32.
    sub = {4: 8, 2: 16, 1: 32}.get(itemsize, 8)

    x_flat = x.reshape(-1)
    rows = n // _LANE          # lane-aligned prefix handled by the kernel
    n_aligned = rows * _LANE

    if rows == 0:
        # Tiny input (< 128 elements): not worth a kernel launch.
        return _elu1_jnp(x_flat).reshape(orig_shape)

    # Dtype-aware tile: ~2 MiB per buffer, rounded to the sublane quantum,
    # never larger than the (sub-rounded) slab itself.
    tr = max((_TARGET_TILE_BYTES // (_LANE * itemsize)) // sub * sub, sub)
    tr = min(tr, pl.cdiv(rows, sub) * sub)
    # Keep >= 2 blocks on the parallel axis when possible so v7x's second
    # TensorCore is fed (neutral on v5e/v6e).
    if rows >= 2 * sub and pl.cdiv(rows, tr) < 2:
        tr = max(((rows // 2) // sub) * sub, sub)
    grid = pl.cdiv(rows, tr)

    # Reshape of the aligned prefix is a free bitcast when n is lane-aligned
    # (the common NN case); otherwise only the prefix is sliced, no pad pass.
    x2d = (x_flat if n_aligned == n else x_flat[:n_aligned]).reshape(rows, _LANE)

    out2d = pl.pallas_call(
        _elu1_kernel,
        out_shape=jax.ShapeDtypeStruct((rows, _LANE), dtype),
        grid_spec=pltpu.PrefetchScalarGridSpec(
            num_scalar_prefetch=0,
            grid=(grid,),
            in_specs=[pl.BlockSpec((tr, _LANE), lambda i: (i, 0))],
            out_specs=pl.BlockSpec((tr, _LANE), lambda i: (i, 0)),
        ),
        compiler_params=pltpu.CompilerParams(
            dimension_semantics=("parallel",),
        ),
        cost_estimate=pl.CostEstimate(
            flops=2 * n_aligned,
            transcendentals=n_aligned,
            bytes_accessed=2 * n_aligned * itemsize,
        ),
    )(x2d)

    out_flat = out2d.reshape(-1)
    if n_aligned != n:
        # Unaligned tail (< 128 elems): plain jnp, then a single concat —
        # no whole-array pad + slice HBM round trips.
        out_flat = jnp.concatenate([out_flat, _elu1_jnp(x_flat[n_aligned:])])
    return out_flat.reshape(orig_shape)


def _elu1_ref(x):
    # Pure-JAX reference (computed in f32 for accuracy).
    xf = x.astype(jnp.float32)
    return jnp.where(xf > 0, xf, jnp.expm1(xf)) + 1.0


if __name__ == "__main__":
    key = jax.random.PRNGKey(0)

    # NCHW, matching PyTorch conv-style inputs. Size is lane-aligned -> zero-copy path.
    x_f32 = jax.random.normal(key, (2, 4, 16, 16), dtype=jnp.float32)
    y_f32 = jax.block_until_ready(elu1(x_f32))
    assert y_f32.shape == x_f32.shape and y_f32.dtype == x_f32.dtype
    assert jnp.allclose(y_f32, _elu1_ref(x_f32), atol=1e-6, rtol=1e-6), "f32 mismatch"

    # bf16 path: data stays bf16 in HBM/VMEM; compute widened in-register only.
    x_bf16 = jax.random.normal(jax.random.PRNGKey(1), (2, 4, 16, 16)).astype(jnp.bfloat16)
    y_bf16 = jax.block_until_ready(elu1(x_bf16))
    assert y_bf16.shape == x_bf16.shape and y_bf16.dtype == jnp.bfloat16
    assert jnp.allclose(
        y_bf16.astype(jnp.float32), _elu1_ref(x_bf16), atol=2e-2, rtol=2e-2
    ), "bf16 mismatch"

    # Tiny odd size (< 128 elems): pure-jnp fallback path.
    x_odd = jax.random.normal(jax.random.PRNGKey(2), (3, 5, 7), dtype=jnp.float32)
    y_odd = jax.block_until_ready(elu1(x_odd))
    assert y_odd.shape == x_odd.shape
    assert jnp.allclose(y_odd, _elu1_ref(x_odd), atol=1e-6, rtol=1e-6), "odd-size mismatch"

    # Unaligned size with a kernel-covered prefix + jnp tail (ragged block + concat path).
    x_rag = jax.random.normal(jax.random.PRNGKey(3), (3, 300), dtype=jnp.float32)
    y_rag = jax.block_until_ready(elu1(x_rag))
    assert y_rag.shape == x_rag.shape
    assert jnp.allclose(y_rag, _elu1_ref(x_rag), atol=1e-6, rtol=1e-6), "ragged mismatch"

    print("KERNEL_OK")
</pallas_src>

<mosaic_0001>
module attributes {stable_mosaic.version = 11 : i64} {
  func.func @_elu1_kernel(%arg0: i32, %arg1: memref<8x128xf32, #tpu.memory_space<vmem>>, %arg2: memref<8x128xf32, #tpu.memory_space<vmem>>) attributes {dimension_semantics = [#tpu.dimension_semantics<parallel>], iteration_bounds = array<i64: 2>, scalar_prefetch = 0 : i64, scratch_operands = 0 : i64, tpu.core_type = #tpu.core_type<tc>, window_params = [{transform_indices = @transform_0, window_bounds = array<i64: 8, 128>}, {transform_indices = @transform_1, window_bounds = array<i64: 8, 128>}]} {
    %c0 = arith.constant 0 : index
    %c0_0 = arith.constant 0 : index
    %0 = vector.load %arg1[%c0, %c0_0] : memref<8x128xf32, #tpu.memory_space<vmem>>, vector<8x128xf32>
    %cst = arith.constant 0.000000e+00 : f32
    %1 = vector.broadcast %cst : f32 to vector<8x128xf32>
    %2 = arith.cmpf ogt, %0, %1 : vector<8x128xf32>
    %cst_1 = arith.constant 1.000000e+00 : f32
    %3 = vector.broadcast %cst_1 : f32 to vector<8x128xf32>
    %4 = arith.addf %0, %3 : vector<8x128xf32>
    %5 = math.exp %0 : vector<8x128xf32>
    %6 = arith.select %2, %4, %5 : vector<8x128xi1>, vector<8x128xf32>
    %c0_2 = arith.constant 0 : index
    %c0_3 = arith.constant 0 : index
    %7 = vector.load %arg2[%c0_2, %c0_3] : memref<8x128xf32, #tpu.memory_space<vmem>>, vector<8x128xf32>
    tpu.vector_store %arg2[%c0_2, %c0_3], %6 {strides = array<i32>} : memref<8x128xf32, #tpu.memory_space<vmem>>, vector<8x128xf32>,
    return
  }
  func.func @transform_0(%arg0: i32) -> (i32, i32) {
    %c0_i32 = arith.constant 0 : i32
    %c0_i32_0 = arith.constant 0 : i32
    return %arg0, %c0_i32 : i32, i32
  }
  func.func @transform_1(%arg0: i32) -> (i32, i32) {
    %c0_i32 = arith.constant 0 : i32
    %c0_i32_0 = arith.constant 0 : i32
    return %arg0, %c0_i32 : i32, i32
  }
}

</mosaic_0001>

<llo_original>
// kernel: tpu_custom_call.1
$region0: #{tpu_custom_call.1}
  #allocation0 [shape = 'u32[]', space=smem, size = 0x4, offset = 0x4, fixed_abs, tag = 'smem constant byte address 0x4 - core index']
  #allocation1 [shape = 'u32[72,128]{1,0:T(1,128)}', space=vmem, size = 0x9000, scoped, tag = 'internal scratch']
  %s0 = inlined_call_operand.hbm [shape: f32[16,128], index: 0, kind: input, shape index: {}]
  %s1 = inlined_call_operand.hbm [shape: f32[16,128], index: 1, kind: output, shape index: {}]
  %s2 = sld [smem:[#allocation0]]
  $region41: #{tpu_custom_call.1} parent=0
    _
  %s4 = ssub.s32 1, %s2
  %s5 = scalar_select 0, %s4, %s2
  $region1: #{tpu_custom_call.1} parent=0
    #allocation2 [shape = 'u8[8192]{0}', space=vmem, size = 0x2000, scoped, tag = 'input window, operand 0']
    #allocation3 [shape = 's32[2]{0}', space=sflag, size = 0x8, scoped, tag = 'scoped memory for tpu_custom_call.1']
    #allocation4 [shape = 's32[2]{0}', space=sflag, size = 0x8, scoped, tag = 'scoped memory for tpu_custom_call.1']
    #allocation5 [shape = 'u8[8192]{0}', space=vmem, size = 0x2000, scoped, tag = 'output window, operand 0']
    %6 = vsyncpa [#allocation3], 0
    %s7 = scalar_lea.sflag [#allocation3], 1
    %8 = vsyncpa %s7, 0
    %9 = vsyncpa [#allocation4], 0
    %s10 = scalar_lea.sflag [#allocation4], 1
    %11 = vsyncpa %s10, 0
    loop: start=0, step=1, limit=4
    $region2: #{tpu_custom_call.1} parent=1 // loop_pre_header
      _
    $region3: #{tpu_custom_call.1} parent=1 // loop_header
      %s13 = sphi 0, %s17
      %p14 = scmp.ge.s32.totalorder %s13, 4
      %s23 = sphi 0, %s25
      %s26 = sphi 0, %s23
      %s27 = sphi 0, %s26
      %s43 = sphi 0, %s27
      %s49 = sphi 0, %s51
      %s52 = sphi 0, %s49
      %s53 = sphi 0, %s52
      %s69 = sphi 0, %s53
    $region4: #{tpu_custom_call.1} parent=1 // loop_header_branch
      %16 = sbr.rel (%p14) target = $region8
    $region5: #{tpu_custom_call.1} parent=1 // loop_body
      %s18 = ssub.s32 %s13, 1
      %s19 = ssub.s32 %s13, 2
      %s20 = sadd.s32 %s13, 1
      %s21 = ssub.s32 %s13, %s20
      %p22 = scmp.eq.s32.totalorder %s21, 0
      %s24 = sadd.s32 %s23, 1
      %s25 = scalar_select %p22, %s23, %s24
      %p28 = pneg %p22
      %p29 = scmp.eq.s32.totalorder %s13, 1
      %p30 = por %p28, %p29
      %p31 = scmp.ne.s32.totalorder %s23, %s26
      %p32 = scmp.eq.s32.totalorder %s13, 0
      %p33 = por %p31, %p32
      %p34 = scmp.ne.s32.totalorder %s23, %s26
      %p35 = scmp.eq.s32.totalorder %s18, 1
      %p36 = por %p34, %p35
      %p37 = scmp.ne.s32.totalorder %s26, %s27
      %p38 = scmp.eq.s32.totalorder %s18, 0
      %p39 = por %p37, %p38
      %p40 = scmp.ne.s32.totalorder %s26, %s27
      %p41 = scmp.eq.s32.totalorder %s19, 1
      %p42 = por %p40, %p41
      %p44 = scmp.ne.s32.totalorder %s27, %s43
      %p45 = scmp.eq.s32.totalorder %s19, 0
      %p46 = por %p44, %p45
      %s47 = ssub.s32 %s13, %s20
      %p48 = scmp.eq.s32.totalorder %s47, 0
      %s50 = sadd.s32 %s49, 1
      %s51 = scalar_select %p48, %s49, %s50
      %p54 = pneg %p48
      %p55 = scmp.eq.s32.totalorder %s13, 1
      %p56 = por %p54, %p55
      %p57 = scmp.ne.s32.totalorder %s49, %s52
      %p58 = scmp.eq.s32.totalorder %s13, 0
      %p59 = por %p57, %p58
      %p60 = scmp.ne.s32.totalorder %s49, %s52
      %p61 = scmp.eq.s32.totalorder %s18, 1
      %p62 = por %p60, %p61
      %p63 = scmp.ne.s32.totalorder %s52, %s53
      %p64 = scmp.eq.s32.totalorder %s18, 0
      %p65 = por %p63, %p64
      %p66 = scmp.ne.s32.totalorder %s52, %s53
      %p67 = scmp.eq.s32.totalorder %s19, 1
      %p68 = por %p66, %p67
      %p70 = scmp.ne.s32.totalorder %s53, %s69
      %p71 = scmp.eq.s32.totalorder %s19, 0
      %p72 = por %p70, %p71
      %p73 = scmp.le.s32.totalorder 1, %s13
      %p74 = scmp.lt.s32.totalorder %s13, 3
      %p75 = pnand %p73, %p74
      %p76 = pneg %p75
      // Predicated region
      $region9: #{tpu_custom_call.1} parent=5 // pred_check
        _
      $region10: #{tpu_custom_call.1} parent=5 // pred_check_branch
        %78 = sbr.rel (%p75) target = $region12
      $region11: #{tpu_custom_call.1} parent=5 // pred_region
        %s79 = ssub.s32 %s13, 1
      $region12: #{tpu_custom_call.1} parent=5 // pred_fallthru
        _
      %p80 = scmp.lt.s32.totalorder %s13, 2
      // Predicated region
      $region13: #{tpu_custom_call.1} parent=5 // pred_check
        %p81 = pneg %p80
      $region14: #{tpu_custom_call.1} parent=5 // pred_check_branch
        %83 = sbr.rel (%p81) target = $region16
      $region15: #{tpu_custom_call.1} parent=5 // pred_region
        // Predicated region
        $region17: #{tpu_custom_call.1} parent=15 // pred_check
          %p84 = pneg %p33
        $region18: #{tpu_custom_call.1} parent=15 // pred_check_branch
          %86 = sbr.rel (%p84) target = $region20
        $region19: #{tpu_custom_call.1} parent=15 // pred_region
          %s87 = sand.u32 %s23, 1
          %s88 = scalar_lea.sflag [#allocation3], %s87
          %s89 = sand.u32 %s23, 1
          %s90 = smul.addr %s89, 8
          %s91 = scalar_lea.vmem [#allocation2], %s90
          %93 = vsyncadd %s88, 0
          %s94 = smul.addr %s13, 8
          %s95 = scalar_lea.hbm %s0, %s94
          %s97 = sshll.u32 %s95, 4
          %s98 = int_to_ptr.hbm [resolvable:$true] %s97
          %s99 = sshll.u32 %s91, 4
          %s100 = int_to_ptr.vmem [resolvable:$true] %s99
          %102 = dma.hbm_to_vmem [thread:$0]  %s98, 128, %s100, %s88
        $region20: #{tpu_custom_call.1} parent=15 // pred_fallthru
          _
      $region16: #{tpu_custom_call.1} parent=5 // pred_fallthru
        _
      %p103 = scmp.le.s32.totalorder 1, %s13
      %p104 = scmp.lt.s32.totalorder %s13, 3
      %p105 = pnand %p103, %p104
      %p106 = pneg %p105
      // Predicated region
      $region21: #{tpu_custom_call.1} parent=5 // pred_check
        _
      $region22: #{tpu_custom_call.1} parent=5 // pred_check_branch
        %108 = sbr.rel (%p105) target = $region24
      $region23: #{tpu_custom_call.1} parent=5 // pred_region
        %s109 = ssub.s32 %s13, 1
        %s110 = sand.u32 %s26, 1
        %s111 = scalar_lea.sflag [#allocation3], %s110
        %s112 = sand.u32 %s26, 1
        %s113 = smul.addr %s112, 8
        %s114 = scalar_lea.vmem [#allocation2], %s113
        // Predicated region
        $region25: #{tpu_custom_call.1} parent=23 // pred_check
          %p115 = pneg %p39
        $region26: #{tpu_custom_call.1} parent=23 // pred_check_branch
          %117 = sbr.rel (%p115) target = $region28
        $region27: #{tpu_custom_call.1} parent=23 // pred_region
          %119 = dma.done %s111, 128
        $region28: #{tpu_custom_call.1} parent=23 // pred_fallthru
          _
        %s120 = sand.u32 %s26, 1
        %s121 = scalar_lea.sflag [#allocation3], %s120
        %s122 = sand.u32 %s26, 1
        %s123 = smul.addr %s122, 8
        %s124 = scalar_lea.vmem [#allocation2], %s123
        %p125 = pneg %p39
        %p126 = pneg %p36
        %p127 = pneg %p65
        %p128 = pneg %p62
        %s129 = sand.u32 %s52, 1
        %s130 = scalar_lea.sflag [#allocation4], %s129
        %s131 = sand.u32 %s52, 1
        %s132 = smul.addr %s131, 8
        %s133 = scalar_lea.vmem [#allocation5], %s132
        %v134 = vld [vmem:[%s114] sm:$0xff]
        %vm135 = vcmp.gt.f32.partialorder %v134, 0.0
        %v136 = vadd.f32 %v134, 1.0
        %v137 = vmul.f32 %v134, 1.442695
        %v138 = vpow.pop %v137
        %v139 = vsel %vm135, %v136, %v138
        %140 = vst [vmem:[%s133] sm:$0xff] %v139
        %s141 = sand.u32 %s52, 1
        %s142 = scalar_lea.sflag [#allocation4], %s141
        %s143 = sand.u32 %s52, 1
        %s144 = smul.addr %s143, 8
        %s145 = scalar_lea.vmem [#allocation5], %s144
        // Predicated region
        $region29: #{tpu_custom_call.1} parent=23 // pred_check
          %p146 = pneg %p62
        $region30: #{tpu_custom_call.1} parent=23 // pred_check_branch
          %148 = sbr.rel (%p146) target = $region32
        $region31: #{tpu_custom_call.1} parent=23 // pred_region
          %150 = vsyncadd %s142, 0
          %s151 = smul.addr %s18, 8
          %s152 = scalar_lea.hbm %s1, %s151
          %s154 = sshll.u32 %s145, 4
          %s155 = int_to_ptr.vmem [resolvable:$true] %s154
          %s156 = sshll.u32 %s152, 4
          %s157 = int_to_ptr.hbm [resolvable:$true] %s156
          %159 = dma.vmem_to_hbm [thread:$0]  %s155, 128, %s157, %s142
        $region32: #{tpu_custom_call.1} parent=23 // pred_fallthru
          _
      $region24: #{tpu_custom_call.1} parent=5 // pred_fallthru
        _
      %p160 = scmp.le.s32.totalorder 2, %s13
      // Predicated region
      $region33: #{tpu_custom_call.1} parent=5 // pred_check
        %p161 = pneg %p160
      $region34: #{tpu_custom_call.1} parent=5 // pred_check_branch
        %163 = sbr.rel (%p161) target = $region36
      $region35: #{tpu_custom_call.1} parent=5 // pred_region
        %s164 = ssub.s32 %s13, 2
        // Predicated region
        $region37: #{tpu_custom_call.1} parent=35 // pred_check
          %p165 = pneg %p68
        $region38: #{tpu_custom_call.1} parent=35 // pred_check_branch
          %167 = sbr.rel (%p165) target = $region40
        $region39: #{tpu_custom_call.1} parent=35 // pred_region
          %s168 = sand.u32 %s53, 1
          %s169 = scalar_lea.sflag [#allocation4], %s168
          %s170 = sand.u32 %s53, 1
          %s171 = smul.addr %s170, 8
          %s172 = scalar_lea.vmem [#allocation5], %s171
          %174 = dma.done %s169, 128
        $region40: #{tpu_custom_call.1} parent=35 // pred_fallthru
          _
      $region36: #{tpu_custom_call.1} parent=5 // pred_fallthru
        _
    $region6: #{tpu_custom_call.1} parent=1 // loop_footer
      %s17 = sadd.s32 1, %s13
    $region7: #{tpu_custom_call.1} parent=1 // loop_footer_branch
      %12 = sbr.rel target = $region3
    $region8: #{tpu_custom_call.1} parent=1 // loop_exit
      _
    %175 = vsyncpa [#allocation3], 1
    %s176 = scalar_lea.sflag [#allocation3], 1
    %177 = vsyncpa %s176, 1
    %178 = vsyncpa [#allocation4], 1
    %s179 = scalar_lea.sflag [#allocation4], 1
    %180 = vsyncpa %s179, 1

</llo_original>
